<compile_context>
chip_gen: v6e
topology: v6e:2x2x1
jax: 0.10.0
libtpu: 0.0.40
codegen_flags: <defaults>
</compile_context>

<pallas_src>
import functools

import jax
import jax.numpy as jnp
import numpy as np
from jax.experimental import pallas as pl
from jax.experimental.pallas import tpu as pltpu

EPS = 1e-5  # PyTorch GroupNorm default


def _block_kernel(p_ref, w_ref, b_ref, gamma_ref, beta_ref, gmat_ref, o_ref):
    """One batch element per grid step, channel-first / spatial-on-lanes layout.

    p_ref     : (1, 9*Cin, H*W)  im2col patches for this batch element
    w_ref     : (Cout, 9*Cin)    conv weight, reshaped to match patch K ordering
    b_ref     : (Cout, 1)        conv bias
    gamma_ref : (Cout, 1)        GroupNorm weight
    beta_ref  : (Cout, 1)        GroupNorm bias
    gmat_ref  : (Cout, Cout)     same-group averaging matrix: 1/(cs*H*W) if the two
                                 channels belong to the same group, else 0
    o_ref     : (1, Cout, H*W)   output tile (lane-dense)
    """
    # --- fused 3x3 conv: single MXU matmul, K = 9*Cin ---
    acc = jnp.dot(w_ref[...], p_ref[0], preferred_element_type=jnp.float32)  # (Cout, HW)
    acc = acc + b_ref[...]  # (Cout, 1) broadcasts along lanes

    # --- GroupNorm (biased variance, eps=1e-5), all groups in one pass ---
    # gmat @ acc averages over channels-within-group (already scaled by 1/(cs*HW));
    # the lane reduction then sums over spatial, giving the per-group mean
    # broadcast back to every channel of that group.
    mean_c = jnp.sum(
        jnp.dot(gmat_ref[...], acc, preferred_element_type=jnp.float32),
        axis=1, keepdims=True)                                               # (Cout, 1)
    centered = acc - mean_c
    var_c = jnp.sum(
        jnp.dot(gmat_ref[...], centered * centered,
                preferred_element_type=jnp.float32),
        axis=1, keepdims=True)                                               # (Cout, 1)
    z = centered * jax.lax.rsqrt(var_c + EPS) * gamma_ref[...] + beta_ref[...]

    # --- Mish: z * tanh(softplus(z)), numerically stable softplus ---
    sp = jnp.maximum(z, 0.0) + jnp.log1p(jnp.exp(-jnp.abs(z)))
    o_ref[0] = z * jnp.tanh(sp)                                              # one unmasked store


def block_forward(x_nchw, w_oihw, b, gamma, beta, *, groups=8):
    """Pallas version of Block.forward. Input/output are NCHW like PyTorch."""
    N, Cin, H, W = x_nchw.shape
    Cout = w_oihw.shape[0]
    assert Cout % groups == 0
    cs = Cout // groups
    HW = H * W
    K9 = 9 * Cin

    x = x_nchw.astype(jnp.float32)

    # Glue (plain JAX): zero-pad once and build the im2col patch matrix
    # (N, 9*Cin, H*W) with K ordered as tap-major (tap = dy*3 + dx), cin-minor.
    xp = jnp.pad(x, ((0, 0), (0, 0), (1, 1), (1, 1)))             # (N, Cin, H+2, W+2)
    taps = [xp[:, :, dy:dy + H, dx:dx + W] for dy in range(3) for dx in range(3)]
    patches = jnp.stack(taps, axis=1).reshape(N, K9, HW)          # (N, 9*Cin, H*W)

    # Conv weight -> (Cout, 9*Cin), same K ordering as patches.
    w2 = jnp.transpose(w_oihw.astype(jnp.float32), (0, 2, 3, 1)).reshape(Cout, K9)

    b2 = b.reshape(Cout, 1).astype(jnp.float32)
    g2 = gamma.reshape(Cout, 1).astype(jnp.float32)
    be2 = beta.reshape(Cout, 1).astype(jnp.float32)

    # Same-group averaging matrix: gmat[c, c'] = 1/(cs*HW) if same group else 0.
    group_id = np.arange(Cout) // cs
    gmat = jnp.asarray(
        (group_id[:, None] == group_id[None, :]).astype(np.float32) / (cs * HW))

    out = pl.pallas_call(
        _block_kernel,
        out_shape=jax.ShapeDtypeStruct((N, Cout, HW), jnp.float32),
        grid=(N,),
        in_specs=[
            pl.BlockSpec((1, K9, HW), lambda n: (n, 0, 0)),
            pl.BlockSpec((Cout, K9), lambda n: (0, 0)),
            pl.BlockSpec((Cout, 1), lambda n: (0, 0)),
            pl.BlockSpec((Cout, 1), lambda n: (0, 0)),
            pl.BlockSpec((Cout, 1), lambda n: (0, 0)),
            pl.BlockSpec((Cout, Cout), lambda n: (0, 0)),
        ],
        out_specs=pl.BlockSpec((1, Cout, HW), lambda n: (n, 0, 0)),
        compiler_params=pltpu.CompilerParams(dimension_semantics=("parallel",)),
    )(patches, w2, b2, g2, be2, gmat)

    # (N, Cout, H*W) -> (N, Cout, H, W): contiguous reshape, no transpose needed.
    return out.reshape(N, Cout, H, W)


def _reference_block(x_nchw, w_oihw, b, gamma, beta, *, groups=8, eps=EPS):
    """Pure-JAX reference (matches PyTorch semantics) for validation."""
    y = jax.lax.conv_general_dilated(
        x_nchw.astype(jnp.float32), w_oihw.astype(jnp.float32),
        window_strides=(1, 1), padding=((1, 1), (1, 1)),
        dimension_numbers=("NCHW", "OIHW", "NCHW"))
    y = y + b[None, :, None, None]
    N, C, H, W = y.shape
    yg = y.reshape(N, groups, C // groups, H, W)
    mean = yg.mean(axis=(2, 3, 4), keepdims=True)
    var = jnp.square(yg - mean).mean(axis=(2, 3, 4), keepdims=True)
    yn = ((yg - mean) / jnp.sqrt(var + eps)).reshape(N, C, H, W)
    z = yn * gamma[None, :, None, None] + beta[None, :, None, None]
    sp = jnp.logaddexp(z, 0.0)
    return z * jnp.tanh(sp)


if __name__ == "__main__":
    # Small shapes consistent with Block(dim=4, dim_out=16, groups=8)
    N, Cin, Cout, H, W, groups = 2, 4, 16, 16, 16, 8

    key = jax.random.PRNGKey(0)
    kx, kw, kb, kg, kbe = jax.random.split(key, 5)

    x = jax.random.normal(kx, (N, Cin, H, W), dtype=jnp.float32)
    fan_in = Cin * 3 * 3
    w = jax.random.normal(kw, (Cout, Cin, 3, 3), dtype=jnp.float32) / np.sqrt(fan_in)
    b = 0.1 * jax.random.normal(kb, (Cout,), dtype=jnp.float32)
    gamma = 1.0 + 0.1 * jax.random.normal(kg, (Cout,), dtype=jnp.float32)
    beta = 0.1 * jax.random.normal(kbe, (Cout,), dtype=jnp.float32)

    out = block_forward(x, w, b, gamma, beta, groups=groups)
    out = jax.block_until_ready(out)

    ref = jax.block_until_ready(_reference_block(x, w, b, gamma, beta, groups=groups))
    assert out.shape == (N, Cout, H, W)
    assert np.allclose(np.asarray(out), np.asarray(ref), rtol=1e-4, atol=1e-4), (
        "Pallas output does not match reference")

    print("KERNEL_OK")
</pallas_src>

<mosaic_0001>
module attributes {stable_mosaic.version = 11 : i64} {
  func.func @_block_kernel(%arg0: i32, %arg1: memref<1x36x256xf32, #tpu.memory_space<vmem>>, %arg2: memref<16x36xf32, #tpu.memory_space<vmem>>, %arg3: memref<16x1xf32, #tpu.memory_space<vmem>>, %arg4: memref<16x1xf32, #tpu.memory_space<vmem>>, %arg5: memref<16x1xf32, #tpu.memory_space<vmem>>, %arg6: memref<16x16xf32, #tpu.memory_space<vmem>>, %arg7: memref<1x16x256xf32, #tpu.memory_space<vmem>>) attributes {dimension_semantics = [#tpu.dimension_semantics<parallel>], iteration_bounds = array<i64: 2>, scalar_prefetch = 0 : i64, scratch_operands = 0 : i64, tpu.core_type = #tpu.core_type<tc>, window_params = [{transform_indices = @transform_0, window_bounds = array<i64: 1, 36, 256>}, {pipeline_mode = #tpu.pipeline_mode<synchronous>, transform_indices = @transform_1, window_bounds = array<i64: 16, 36>}, {pipeline_mode = #tpu.pipeline_mode<synchronous>, transform_indices = @transform_2, window_bounds = array<i64: 16, 1>}, {pipeline_mode = #tpu.pipeline_mode<synchronous>, transform_indices = @transform_3, window_bounds = array<i64: 16, 1>}, {pipeline_mode = #tpu.pipeline_mode<synchronous>, transform_indices = @transform_4, window_bounds = array<i64: 16, 1>}, {pipeline_mode = #tpu.pipeline_mode<synchronous>, transform_indices = @transform_5, window_bounds = array<i64: 16, 16>}, {transform_indices = @transform_6, window_bounds = array<i64: 1, 16, 256>}]} {
    %c0 = arith.constant 0 : index
    %c0_0 = arith.constant 0 : index
    %0 = vector.load %arg2[%c0, %c0_0] : memref<16x36xf32, #tpu.memory_space<vmem>>, vector<16x36xf32>
    %c0_1 = arith.constant 0 : index
    %c0_2 = arith.constant 0 : index
    %c0_3 = arith.constant 0 : index
    %1 = vector.load %arg1[%c0_1, %c0_2, %c0_3] : memref<1x36x256xf32, #tpu.memory_space<vmem>>, vector<1x36x256xf32>
    %2 = vector.shape_cast %1 : vector<1x36x256xf32> to vector<36x256xf32>
    %cst = arith.constant dense<0.000000e+00> : vector<16x256xf32>
    %3 = tpu.matmul %0, %2, %cst {dimension_numbers = #tpu.dot_dimension_numbers<[1], [0], [0], [1], [0, 0, 1, 1], [], []>} : vector<16x36xf32>, vector<36x256xf32>, vector<16x256xf32> -> vector<16x256xf32>
    %c0_4 = arith.constant 0 : index
    %c0_5 = arith.constant 0 : index
    %4 = vector.load %arg3[%c0_4, %c0_5] : memref<16x1xf32, #tpu.memory_space<vmem>>, vector<16x1xf32>
    %5 = vector.broadcast %4 : vector<16x1xf32> to vector<16x256xf32>
    %6 = arith.addf %3, %5 : vector<16x256xf32>
    %c0_6 = arith.constant 0 : index
    %c0_7 = arith.constant 0 : index
    %7 = vector.load %arg6[%c0_6, %c0_7] : memref<16x16xf32, #tpu.memory_space<vmem>>, vector<16x16xf32>
    %cst_8 = arith.constant dense<0.000000e+00> : vector<16x256xf32>
    %8 = tpu.matmul %7, %6, %cst_8 {dimension_numbers = #tpu.dot_dimension_numbers<[1], [0], [0], [1], [0, 0, 1, 1], [], []>} : vector<16x16xf32>, vector<16x256xf32>, vector<16x256xf32> -> vector<16x256xf32>
    %cst_9 = arith.constant dense<0.000000e+00> : vector<16xf32>
    %9 = vector.multi_reduction <add>, %8, %cst_9 [1] : vector<16x256xf32> to vector<16xf32>
    %10 = vector.shape_cast %9 : vector<16xf32> to vector<16x1xf32>
    %11 = vector.broadcast %10 : vector<16x1xf32> to vector<16x256xf32>
    %12 = arith.subf %6, %11 : vector<16x256xf32>
    %c0_10 = arith.constant 0 : index
    %c0_11 = arith.constant 0 : index
    %13 = vector.load %arg6[%c0_10, %c0_11] : memref<16x16xf32, #tpu.memory_space<vmem>>, vector<16x16xf32>
    %14 = arith.mulf %12, %12 : vector<16x256xf32>
    %cst_12 = arith.constant dense<0.000000e+00> : vector<16x256xf32>
    %15 = tpu.matmul %13, %14, %cst_12 {dimension_numbers = #tpu.dot_dimension_numbers<[1], [0], [0], [1], [0, 0, 1, 1], [], []>} : vector<16x16xf32>, vector<16x256xf32>, vector<16x256xf32> -> vector<16x256xf32>
    %cst_13 = arith.constant dense<0.000000e+00> : vector<16xf32>
    %16 = vector.multi_reduction <add>, %15, %cst_13 [1] : vector<16x256xf32> to vector<16xf32>
    %17 = vector.shape_cast %16 : vector<16xf32> to vector<16x1xf32>
    %cst_14 = arith.constant 9.99999974E-6 : f32
    %18 = vector.broadcast %cst_14 : f32 to vector<16x1xf32>
    %19 = arith.addf %17, %18 : vector<16x1xf32>
    %20 = math.rsqrt %19 : vector<16x1xf32>
    %21 = vector.broadcast %20 : vector<16x1xf32> to vector<16x256xf32>
    %22 = arith.mulf %12, %21 : vector<16x256xf32>
    %c0_15 = arith.constant 0 : index
    %c0_16 = arith.constant 0 : index
    %23 = vector.load %arg4[%c0_15, %c0_16] : memref<16x1xf32, #tpu.memory_space<vmem>>, vector<16x1xf32>
    %24 = vector.broadcast %23 : vector<16x1xf32> to vector<16x256xf32>
    %25 = arith.mulf %22, %24 : vector<16x256xf32>
    %c0_17 = arith.constant 0 : index
    %c0_18 = arith.constant 0 : index
    %26 = vector.load %arg5[%c0_17, %c0_18] : memref<16x1xf32, #tpu.memory_space<vmem>>, vector<16x1xf32>
    %27 = vector.broadcast %26 : vector<16x1xf32> to vector<16x256xf32>
    %28 = arith.addf %25, %27 : vector<16x256xf32>
    %cst_19 = arith.constant 0.000000e+00 : f32
    %29 = vector.broadcast %cst_19 : f32 to vector<16x256xf32>
    %30 = arith.maximumf %28, %29 : vector<16x256xf32>
    %31 = math.absf %28 : vector<16x256xf32>
    %cst_20 = arith.constant 0.000000e+00 : f32
    %32 = vector.broadcast %cst_20 : f32 to vector<16x256xf32>
    %33 = arith.subf %32, %31 : vector<16x256xf32>
    %34 = math.exp %33 : vector<16x256xf32>
    %35 = math.log1p %34 : vector<16x256xf32>
    %36 = arith.addf %30, %35 : vector<16x256xf32>
    %37 = math.tanh %36 : vector<16x256xf32>
    %38 = arith.mulf %28, %37 : vector<16x256xf32>
    %c0_21 = arith.constant 0 : index
    %c0_22 = arith.constant 0 : index
    %c0_23 = arith.constant 0 : index
    %39 = vector.load %arg7[%c0_21, %c0_22, %c0_23] : memref<1x16x256xf32, #tpu.memory_space<vmem>>, vector<1x16x256xf32>
    %40 = vector.shape_cast %39 : vector<1x16x256xf32> to vector<16x256xf32>
    %41 = vector.shape_cast %38 : vector<16x256xf32> to vector<1x16x256xf32>
    tpu.vector_store %arg7[%c0_21, %c0_22, %c0_23], %41 {strides = array<i32>} : memref<1x16x256xf32, #tpu.memory_space<vmem>>, vector<1x16x256xf32>,
    return
  }
  func.func @transform_0(%arg0: i32) -> (i32, i32, i32) {
    %c0_i32 = arith.constant 0 : i32
    %c0_i32_0 = arith.constant 0 : i32
    %c0_i32_1 = arith.constant 0 : i32
    return %arg0, %c0_i32, %c0_i32_0 : i32, i32, i32
  }
  func.func @transform_1(%arg0: i32) -> (i32, i32) {
    %c0_i32 = arith.constant 0 : i32
    %c0_i32_0 = arith.constant 0 : i32
    %c0_i32_1 = arith.constant 0 : i32
    return %c0_i32, %c0_i32_0 : i32, i32
  }
  func.func @transform_2(%arg0: i32) -> (i32, i32) {
    %c0_i32 = arith.constant 0 : i32
    %c0_i32_0 = arith.constant 0 : i32
    %c0_i32_1 = arith.constant 0 : i32
    return %c0_i32, %c0_i32_0 : i32, i32
  }
  func.func @transform_3(%arg0: i32) -> (i32, i32) {
    %c0_i32 = arith.constant 0 : i32
    %c0_i32_0 = arith.constant 0 : i32
    %c0_i32_1 = arith.constant 0 : i32
    return %c0_i32, %c0_i32_0 : i32, i32
  }
  func.func @transform_4(%arg0: i32) -> (i32, i32) {
    %c0_i32 = arith.constant 0 : i32
    %c0_i32_0 = arith.constant 0 : i32
    %c0_i32_1 = arith.constant 0 : i32
    return %c0_i32, %c0_i32_0 : i32, i32
  }
  func.func @transform_5(%arg0: i32) -> (i32, i32) {
    %c0_i32 = arith.constant 0 : i32
    %c0_i32_0 = arith.constant 0 : i32
    %c0_i32_1 = arith.constant 0 : i32
    return %c0_i32, %c0_i32_0 : i32, i32
  }
  func.func @transform_6(%arg0: i32) -> (i32, i32, i32) {
    %c0_i32 = arith.constant 0 : i32
    %c0_i32_0 = arith.constant 0 : i32
    %c0_i32_1 = arith.constant 0 : i32
    return %arg0, %c0_i32, %c0_i32_0 : i32, i32, i32
  }
}

</mosaic_0001>

<llo_original>
// kernel: tpu_custom_call.1
$region0: #{tpu_custom_call.1}
  #allocation0 [shape = 'u32[]', space=smem, size = 0x4, offset = 0x4, fixed_abs, tag = 'smem constant byte address 0x4 - core index']
  #allocation1 [shape = 'u32[144,128]{1,0:T(1,128)}', space=vmem, size = 0x12000, scoped, tag = 'internal scratch']
  %s0 = inlined_call_operand.vmem [shape: f32[2,36,256], index: 0, kind: input, shape index: {}]
  %s1 = inlined_call_operand.vmem [shape: f32[16,36], index: 1, kind: input, shape index: {}]
  %s2 = inlined_call_operand.vmem [shape: f32[16,1], index: 2, kind: input, shape index: {}]
  %s3 = inlined_call_operand.vmem [shape: f32[16,1], index: 3, kind: input, shape index: {}]
  %s4 = inlined_call_operand.vmem [shape: f32[16,1], index: 4, kind: input, shape index: {}]
  %s5 = inlined_call_operand.vmem [shape: f32[16,16], index: 5, kind: input, shape index: {}]
  %s6 = inlined_call_operand.hbm [shape: f32[2,16,256], index: 6, kind: output, shape index: {}]
  %s7 = sld [smem:[#allocation0]]
  $region57: #{tpu_custom_call.1} parent=0
    _
  %s9 = ssub.s32 1, %s7
  %s10 = scalar_select 0, %s9, %s7
  $region1: #{tpu_custom_call.1} parent=0
    #allocation2 [shape = 'u8[32768]{0}', space=vmem, size = 0x8000, scoped, tag = 'output window, operand 0']
    #allocation3 [shape = 's32[2]{0}', space=sflag, size = 0x8, scoped, tag = 'scoped memory for tpu_custom_call.1']
    %11 = vsyncpa [#allocation3], 0
    %s12 = scalar_lea.sflag [#allocation3], 1
    %13 = vsyncpa %s12, 0
    loop: start=0, step=1, limit=4
    $region2: #{tpu_custom_call.1} parent=1 // loop_pre_header
      _
    $region3: #{tpu_custom_call.1} parent=1 // loop_header
      %s15 = sphi 0, %s19
      %p16 = scmp.ge.s32.totalorder %s15, 4
      %s25 = sphi 0, %s27
      %s28 = sphi 0, %s25
      %s29 = sphi 0, %s28
      %s45 = sphi 0, %s29
      %s49 = sphi 0, %s49
      %s51 = sphi 0, %s49
      %s52 = sphi 0, %s51
      %s66 = sphi 0, %s52
      %s70 = sphi 0, %s70
      %s72 = sphi 0, %s70
      %s73 = sphi 0, %s72
      %s87 = sphi 0, %s73
      %s91 = sphi 0, %s91
      %s93 = sphi 0, %s91
      %s94 = sphi 0, %s93
      %s108 = sphi 0, %s94
      %s112 = sphi 0, %s112
      %s114 = sphi 0, %s112
      %s115 = sphi 0, %s114
      %s129 = sphi 0, %s115
      %s133 = sphi 0, %s133
      %s135 = sphi 0, %s133
      %s136 = sphi 0, %s135
      %s150 = sphi 0, %s136
      %s156 = sphi 0, %s158
      %s159 = sphi 0, %s156
      %s160 = sphi 0, %s159
      %s176 = sphi 0, %s160
    $region4: #{tpu_custom_call.1} parent=1 // loop_header_branch
      %18 = sbr.rel (%p16) target = $region8
    $region5: #{tpu_custom_call.1} parent=1 // loop_body
      %s20 = ssub.s32 %s15, 1
      %s21 = ssub.s32 %s15, 2
      %s22 = sadd.s32 %s15, 1
      %s23 = ssub.s32 %s15, %s22
      %p24 = scmp.eq.s32.totalorder %s23, 0
      %s26 = sadd.s32 %s25, 1
      %s27 = scalar_select %p24, %s25, %s26
      %p30 = pneg %p24
      %p31 = scmp.eq.s32.totalorder %s15, 1
      %p32 = por %p30, %p31
      %p33 = scmp.ne.s32.totalorder %s25, %s28
      %p34 = scmp.eq.s32.totalorder %s15, 0
      %p35 = por %p33, %p34
      %p36 = scmp.ne.s32.totalorder %s25, %s28
      %p37 = scmp.eq.s32.totalorder %s20, 1
      %p38 = por %p36, %p37
      %p39 = scmp.ne.s32.totalorder %s28, %s29
      %p40 = scmp.eq.s32.totalorder %s20, 0
      %p41 = por %p39, %p40
      %p42 = scmp.ne.s32.totalorder %s28, %s29
      %p43 = scmp.eq.s32.totalorder %s21, 1
      %p44 = por %p42, %p43
      %p46 = scmp.ne.s32.totalorder %s29, %s45
      %p47 = scmp.eq.s32.totalorder %s21, 0
      %p48 = por %p46, %p47
      %s50 = sadd.s32 %s49, 1
      %p53 = scmp.eq.s32.totalorder %s15, 1
      %p54 = scmp.ne.s32.totalorder %s49, %s51
      %p55 = scmp.eq.s32.totalorder %s15, 0
      %p56 = por %p54, %p55
      %p57 = scmp.ne.s32.totalorder %s49, %s51
      %p58 = scmp.eq.s32.totalorder %s20, 1
      %p59 = por %p57, %p58
      %p60 = scmp.ne.s32.totalorder %s51, %s52
      %p61 = scmp.eq.s32.totalorder %s20, 0
      %p62 = por %p60, %p61
      %p63 = scmp.ne.s32.totalorder %s51, %s52
      %p64 = scmp.eq.s32.totalorder %s21, 1
      %p65 = por %p63, %p64
      %p67 = scmp.ne.s32.totalorder %s52, %s66
      %p68 = scmp.eq.s32.totalorder %s21, 0
      %p69 = por %p67, %p68
      %s71 = sadd.s32 %s70, 1
      %p74 = scmp.eq.s32.totalorder %s15, 1
      %p75 = scmp.ne.s32.totalorder %s70, %s72
      %p76 = scmp.eq.s32.totalorder %s15, 0
      %p77 = por %p75, %p76
      %p78 = scmp.ne.s32.totalorder %s70, %s72
      %p79 = scmp.eq.s32.totalorder %s20, 1
      %p80 = por %p78, %p79
      %p81 = scmp.ne.s32.totalorder %s72, %s73
      %p82 = scmp.eq.s32.totalorder %s20, 0
      %p83 = por %p81, %p82
      %p84 = scmp.ne.s32.totalorder %s72, %s73
      %p85 = scmp.eq.s32.totalorder %s21, 1
      %p86 = por %p84, %p85
      %p88 = scmp.ne.s32.totalorder %s73, %s87
      %p89 = scmp.eq.s32.totalorder %s21, 0
      %p90 = por %p88, %p89
      %s92 = sadd.s32 %s91, 1
      %p95 = scmp.eq.s32.totalorder %s15, 1
      %p96 = scmp.ne.s32.totalorder %s91, %s93
      %p97 = scmp.eq.s32.totalorder %s15, 0
      %p98 = por %p96, %p97
      %p99 = scmp.ne.s32.totalorder %s91, %s93
      %p100 = scmp.eq.s32.totalorder %s20, 1
      %p101 = por %p99, %p100
      %p102 = scmp.ne.s32.totalorder %s93, %s94
      %p103 = scmp.eq.s32.totalorder %s20, 0
      %p104 = por %p102, %p103
      %p105 = scmp.ne.s32.totalorder %s93, %s94
      %p106 = scmp.eq.s32.totalorder %s21, 1
      %p107 = por %p105, %p106
      %p109 = scmp.ne.s32.totalorder %s94, %s108
      %p110 = scmp.eq.s32.totalorder %s21, 0
      %p111 = por %p109, %p110
      %s113 = sadd.s32 %s112, 1
      %p116 = scmp.eq.s32.totalorder %s15, 1
      %p117 = scmp.ne.s32.totalorder %s112, %s114
      %p118 = scmp.eq.s32.totalorder %s15, 0
      %p119 = por %p117, %p118
      %p120 = scmp.ne.s32.totalorder %s112, %s114
      %p121 = scmp.eq.s32.totalorder %s20, 1
      %p122 = por %p120, %p121
      %p123 = scmp.ne.s32.totalorder %s114, %s115
      %p124 = scmp.eq.s32.totalorder %s20, 0
      %p125 = por %p123, %p124
      %p126 = scmp.ne.s32.totalorder %s114, %s115
      %p127 = scmp.eq.s32.totalorder %s21, 1
      %p128 = por %p126, %p127
      %p130 = scmp.ne.s32.totalorder %s115, %s129
      %p131 = scmp.eq.s32.totalorder %s21, 0
      %p132 = por %p130, %p131
      %s134 = sadd.s32 %s133, 1
      %p137 = scmp.eq.s32.totalorder %s15, 1
      %p138 = scmp.ne.s32.totalorder %s133, %s135
      %p139 = scmp.eq.s32.totalorder %s15, 0
      %p140 = por %p138, %p139
      %p141 = scmp.ne.s32.totalorder %s133, %s135
      %p142 = scmp.eq.s32.totalorder %s20, 1
      %p143 = por %p141, %p142
      %p144 = scmp.ne.s32.totalorder %s135, %s136
      %p145 = scmp.eq.s32.totalorder %s20, 0
      %p146 = por %p144, %p145
      %p147 = scmp.ne.s32.totalorder %s135, %s136
      %p148 = scmp.eq.s32.totalorder %s21, 1
      %p149 = por %p147, %p148
      %p151 = scmp.ne.s32.totalorder %s136, %s150
      %p152 = scmp.eq.s32.totalorder %s21, 0
      %p153 = por %p151, %p152
      %s154 = ssub.s32 %s15, %s22
      %p155 = scmp.eq.s32.totalorder %s154, 0
      %s157 = sadd.s32 %s156, 1
      %s158 = scalar_select %p155, %s156, %s157
      %p161 = pneg %p155
      %p162 = scmp.eq.s32.totalorder %s15, 1
      %p163 = por %p161, %p162
      %p164 = scmp.ne.s32.totalorder %s156, %s159
      %p165 = scmp.eq.s32.totalorder %s15, 0
      %p166 = por %p164, %p165
      %p167 = scmp.ne.s32.totalorder %s156, %s159
      %p168 = scmp.eq.s32.totalorder %s20, 1
      %p169 = por %p167, %p168
      %p170 = scmp.ne.s32.totalorder %s159, %s160
      %p171 = scmp.eq.s32.totalorder %s20, 0
      %p172 = por %p170, %p171
      %p173 = scmp.ne.s32.totalorder %s159, %s160
      %p174 = scmp.eq.s32.totalorder %s21, 1
      %p175 = por %p173, %p174
      %p177 = scmp.ne.s32.totalorder %s160, %s176
      %p178 = scmp.eq.s32.totalorder %s21, 0
      %p179 = por %p177, %p178
      %p180 = scmp.le.s32.totalorder 1, %s15
      %p181 = scmp.lt.s32.totalorder %s15, 3
      %p182 = pnand %p180, %p181
      %p183 = pneg %p182
      // Predicated region
      $region9: #{tpu_custom_call.1} parent=5 // pred_check
        _
      $region10: #{tpu_custom_call.1} parent=5 // pred_check_branch
        %185 = sbr.rel (%p182) target = $region12
      $region11: #{tpu_custom_call.1} parent=5 // pred_region
        %s186 = ssub.s32 %s15, 1
        // Predicated region
        $region13: #{tpu_custom_call.1} parent=11 // pred_check
          %p187 = pneg %p62
        $region14: #{tpu_custom_call.1} parent=11 // pred_check_branch
          %189 = sbr.rel (%p187) target = $region16
        $region15: #{tpu_custom_call.1} parent=11 // pred_region
          _
        $region16: #{tpu_custom_call.1} parent=11 // pred_fallthru
          _
        // Predicated region
        $region17: #{tpu_custom_call.1} parent=11 // pred_check
          %p190 = pneg %p83
        $region18: #{tpu_custom_call.1} parent=11 // pred_check_branch
          %192 = sbr.rel (%p190) target = $region20
        $region19: #{tpu_custom_call.1} parent=11 // pred_region
          _
        $region20: #{tpu_custom_call.1} parent=11 // pred_fallthru
          _
        // Predicated region
        $region21: #{tpu_custom_call.1} parent=11 // pred_check
          %p193 = pneg %p104
        $region22: #{tpu_custom_call.1} parent=11 // pred_check_branch
          %195 = sbr.rel (%p193) target = $region24
        $region23: #{tpu_custom_call.1} parent=11 // pred_region
          _
        $region24: #{tpu_custom_call.1} parent=11 // pred_fallthru
          _
        // Predicated region
        $region25: #{tpu_custom_call.1} parent=11 // pred_check
          %p196 = pneg %p125
        $region26: #{tpu_custom_call.1} parent=11 // pred_check_branch
          %198 = sbr.rel (%p196) target = $region28
        $region27: #{tpu_custom_call.1} parent=11 // pred_region
          _
        $region28: #{tpu_custom_call.1} parent=11 // pred_fallthru
          _
        // Predicated region
        $region29: #{tpu_custom_call.1} parent=11 // pred_check
          %p199 = pneg %p146
        $region30: #{tpu_custom_call.1} parent=11 // pred_check_branch
          %201 = sbr.rel (%p199) target = $region32
        $region31: #{tpu_custom_call.1} parent=11 // pred_region
          _
        $region32: #{tpu_custom_call.1} parent=11 // pred_fallthru
          _
      $region12: #{tpu_custom_call.1} parent=5 // pred_fallthru
        _
      %p202 = scmp.lt.s32.totalorder %s15, 2
      // Predicated region
      $region33: #{tpu_custom_call.1} parent=5 // pred_check
        %p203 = pneg %p202
      $region34: #{tpu_custom_call.1} parent=5 // pred_check_branch
        %205 = sbr.rel (%p203) target = $region36
      $region35: #{tpu_custom_call.1} parent=5 // pred_region
        // Predicated region
        $region37: #{tpu_custom_call.1} parent=35 // pred_check
          %p206 = pneg %p35
        $region38: #{tpu_custom_call.1} parent=35 // pred_check_branch
          %208 = sbr.rel (%p206) target = $region40
        $region39: #{tpu_custom_call.1} parent=35 // pred_region
          %p209 = scmp.lt.s32.totalorder %s15, 1
          %s210 = scalar_select %p209, %s15, 1
          %s211 = smul.addr %s210, 10
          %s212 = smul.addr %s211, 8
          %s213 = scalar_lea.vmem %s0, %s212
        $region40: #{tpu_custom_call.1} parent=35 // pred_fallthru
          _
      $region36: #{tpu_custom_call.1} parent=5 // pred_fallthru
        _
      %p214 = scmp.le.s32.totalorder 1, %s15
      %p215 = scmp.lt.s32.totalorder %s15, 3
      %p216 = pnand %p214, %p215
      %p217 = pneg %p216
      // Predicated region
      $region41: #{tpu_custom_call.1} parent=5 // pred_check
        _
      $region42: #{tpu_custom_call.1} parent=5 // pred_check_branch
        %219 = sbr.rel (%p216) target = $region44
      $region43: #{tpu_custom_call.1} parent=5 // pred_region
        %s220 = ssub.s32 %s15, 1
        %p221 = scmp.lt.s32.totalorder %s20, 1
        %s222 = scalar_select %p221, %s20, 1
        %s223 = smul.addr %s222, 10
        %s224 = smul.addr %s223, 8
        %s225 = scalar_lea.vmem %s0, %s224
        %p226 = pneg %p41
        %p227 = pneg %p38
        %p228 = pneg %p62
        %p229 = pneg %p59
        %p230 = pneg %p83
        %p231 = pneg %p80
        %p232 = pneg %p104
        %p233 = pneg %p101
        %p234 = pneg %p125
        %p235 = pneg %p122
        %p236 = pneg %p146
        %p237 = pneg %p143
        %p238 = pneg %p172
        %p239 = pneg %p169
        %s240 = sand.u32 %s159, 1
        %s241 = scalar_lea.sflag [#allocation3], %s240
        %s242 = sand.u32 %s159, 1
        %s243 = smul.addr %s242, 32
        %s244 = scalar_lea.vmem [#allocation2], %s243
        %p245 = scmp.lt.s32.totalorder %s20, 1
        %s246 = scalar_select %p245, %s20, 1
        %s247 = smul.addr %s246, 10
        %s248 = smul.addr %s247, 8
        %s249 = scalar_lea.vmem %s0, %s248
        %v250 = vld [vmem:[%s1] sm:$0xff]
        %v251 = vld [vmem:[%s1 + $0x8] sm:$0xff]
        %v252 = vld [vmem:[%s249] sm:$0xff]
        %v253 = vld [vmem:[%s249 + $0x8] sm:$0xff]
        %v254 = vld [vmem:[%s249 + $0x10] sm:$0xff]
        %v255 = vld [vmem:[%s249 + $0x18] sm:$0xff]
        %v256 = vld [vmem:[%s249 + $0x20] sm:$0xff]
        %v257 = vld [vmem:[%s249 + $0x28] sm:$0xff]
        %v258 = vld [vmem:[%s249 + $0x30] sm:$0xff]
        %v259 = vld [vmem:[%s249 + $0x38] sm:$0xff]
        %v260 = vld [vmem:[%s249 + $0x40] sm:$0xf]
        %v261 = vld [vmem:[%s249 + $0x48] sm:$0xf]
        %v262 = vld [vmem:[%s2] sm:$0xff]
        %v263 = vld [vmem:[%s2 + $0x8] sm:$0xff]
        %265 = vset.pattern.permute.xlu0 0
        %266 = vperm.xlu0 %265, %v262
        %v267 = vpop.permute.xlu0 %266
        %270 = vset.pattern.permute.xlu0 0
        %271 = vperm.xlu0 %270, %v263
        %v272 = vpop.permute.xlu0 %271
        %vm274 = vcmask 293888
        %v276 = vsel %vm274, %v250, 0
        %v279 = vsel %vm274, %v251, 0
        %vm281 = vcmask 1043456
        %v283 = vsel %vm281, %v260, 0
        %v286 = vsel %vm281, %v261, 0
        %288 = vmatprep.subr.mxu0 0.0
        %289 = vmatpush1.msra.mxu0 0.0
        %290 = vmatprep.subr.mxu0 0.0
        %291 = vmatpush1.msra.mxu0 0.0
        %292 = vmatprep.subr.mxu0 0.0
        %293 = vmatpush1.msra.mxu0 0.0
        %294 = vmatprep.subr.mxu0 0.0
        %295 = vmatpush1.msra.mxu0 0.0
        %296 = vmatprep.subr.mxu0 0.0
        %297 = vmatpush1.msra.mxu0 0.0
        %298 = vmatprep.subr.mxu0 0.0
        %299 = vmatpush1.msra.mxu0 0.0
        %300 = vmatprep.subr.mxu0 0.0
        %301 = vmatpush1.msra.mxu0 0.0
        %302 = vmatprep.subr.mxu0 0.0
        %303 = vmatpush1.msra.mxu0 0.0
        %304 = vmatprep.subr.mxu0 0.0
        %305 = vmatpush1.msra.mxu0 0.0
        %306 = vmatprep.subr.mxu0 0.0
        %307 = vmatpush1.msra.mxu0 0.0
        %308 = vmatprep.subr.mxu0 0.0
        %309 = vmatpush1.msra.mxu0 0.0
        %310 = vmatprep.subr.mxu0 %v286
        %311 = vmatpush1.msra.mxu0 %v283
        %312 = vmatprep.subr.mxu0 %v259
        %313 = vmatpush1.msra.mxu0 %v258
        %314 = vmatprep.subr.mxu0 %v257
        %315 = vmatpush1.msra.mxu0 %v256
        %316 = vmatprep.subr.mxu0 %v255
        %317 = vmatpush1.msra.mxu0 %v254
        %318 = vmatprep.subr.mxu0 %v253
        %319 = vmatpush1.msra.mxu0 %v252
        %320 = vmatprep.subr.mxu0 0.0
        %321 = vmatpush2.msra.mxu0 0.0
        %322 = vmatprep.subr.mxu0 0.0
        %323 = vmatpush2.msra.mxu0 0.0
        %324 = vmatprep.subr.mxu0 0.0
        %325 = vmatpush2.msra.mxu0 0.0
        %326 = vmatprep.subr.mxu0 0.0
        %327 = vmatpush2.msra.mxu0 0.0
        %328 = vmatprep.subr.mxu0 0.0
        %329 = vmatpush2.msra.mxu0 0.0
        %330 = vmatprep.subr.mxu0 0.0
        %331 = vmatpush2.msra.mxu0 0.0
        %332 = vmatprep.subr.mxu0 0.0
        %333 = vmatpush2.msra.mxu0 0.0
        %334 = vmatprep.subr.mxu0 0.0
        %335 = vmatpush2.msra.mxu0 0.0
        %336 = vmatprep.subr.mxu0 0.0
        %337 = vmatpush2.msra.mxu0 0.0
        %338 = vmatprep.subr.mxu0 0.0
        %339 = vmatpush2.msra.mxu0 0.0
        %340 = vmatprep.subr.mxu0 0.0
        %341 = vmatpush2.msra.mxu0 0.0
        %342 = vmatprep.subr.mxu0 0.0
        %343 = vmatpush2.msra.mxu0 0.0
        %344 = vmatprep.subr.mxu0 0.0
        %345 = vmatpush2.msra.mxu0 0.0
        %346 = vmatprep.subr.mxu0 0.0
        %347 = vmatpush2.msra.mxu0 0.0
        %348 = vmatprep.subr.mxu0 0.0
        %349 = vmatpush2.msra.mxu0 0.0
        %350 = vmatprep.subr.mxu0 0.0
        %351 = vmatpush2.msra.mxu0 0.0
        %352 = vmatprep.mubr.f32.mxu0 0.0
        %353 = vmatmul.mubr.f32.gmra.mxu0 %v276
        %v354 = vpop.f32.mrf.mxu0
        %v355 = vadd.f32 %v267, %v354
        %v356 = vpop.f32.mrf.mxu0
        %v357 = vadd.f32 %v267, %v356
        %358 = vmatprep.mubr.f32.mxu0 0.0
        %359 = vmatmul.mubr.f32.gmra.mxu0 %v279
        %v360 = vpop.f32.mrf.mxu0
        %v361 = vadd.f32 %v272, %v360
        %v362 = vpop.f32.mrf.mxu0
        %v363 = vadd.f32 %v272, %v362
        %364 = vdwg.mxu0
        %v365 = vld [vmem:[%s5] sm:$0xff]
        %v366 = vld [vmem:[%s5 + $0x8] sm:$0xff]
        %vm367 = vcmask 130048
        %v369 = vsel %vm367, %v365, 0
        %v372 = vsel %vm367, %v366, 0
        %374 = vmatprep.subr.mxu0 0.0
        %375 = vmatpush1.msra.mxu0 0.0
        %376 = vmatprep.subr.mxu0 0.0
        %377 = vmatpush1.msra.mxu0 0.0
        %378 = vmatprep.subr.mxu0 0.0
        %379 = vmatpush1.msra.mxu0 0.0
        %380 = vmatprep.subr.mxu0 0.0
        %381 = vmatpush1.msra.mxu0 0.0
        %382 = vmatprep.subr.mxu0 0.0
        %383 = vmatpush1.msra.mxu0 0.0
        %384 = vmatprep.subr.mxu0 0.0
        %385 = vmatpush1.msra.mxu0 0.0
        %386 = vmatprep.subr.mxu0 0.0
        %387 = vmatpush1.msra.mxu0 0.0
        %388 = vmatprep.subr.mxu0 0.0
        %389 = vmatpush1.msra.mxu0 0.0
        %390 = vmatprep.subr.mxu0 0.0
        %391 = vmatpush1.msra.mxu0 0.0
        %392 = vmatprep.subr.mxu0 0.0
        %393 = vmatpush1.msra.mxu0 0.0
        %394 = vmatprep.subr.mxu0 0.0
        %395 = vmatpush1.msra.mxu0 0.0
        %396 = vmatprep.subr.mxu0 0.0
        %397 = vmatpush1.msra.mxu0 0.0
        %398 = vmatprep.subr.mxu0 0.0
        %399 = vmatpush1.msra.mxu0 0.0
        %400 = vmatprep.subr.mxu0 0.0
        %401 = vmatpush1.msra.mxu0 0.0
        %402 = vmatprep.subr.mxu0 %v363
        %403 = vmatpush1.msra.mxu0 %v361
        %404 = vmatprep.subr.mxu0 %v357
        %405 = vmatpush1.msra.mxu0 %v355
        %406 = vmatprep.subr.mxu0 0.0
        %407 = vmatpush2.msra.mxu0 0.0
        %408 = vmatprep.subr.mxu0 0.0
        %409 = vmatpush2.msra.mxu0 0.0
        %410 = vmatprep.subr.mxu0 0.0
        %411 = vmatpush2.msra.mxu0 0.0
        %412 = vmatprep.subr.mxu0 0.0
        %413 = vmatpush2.msra.mxu0 0.0
        %414 = vmatprep.subr.mxu0 0.0
        %415 = vmatpush2.msra.mxu0 0.0
        %416 = vmatprep.subr.mxu0 0.0
        %417 = vmatpush2.msra.mxu0 0.0
        %418 = vmatprep.subr.mxu0 0.0
        %419 = vmatpush2.msra.mxu0 0.0
        %420 = vmatprep.subr.mxu0 0.0
        %421 = vmatpush2.msra.mxu0 0.0
        %422 = vmatprep.subr.mxu0 0.0
        %423 = vmatpush2.msra.mxu0 0.0
        %424 = vmatprep.subr.mxu0 0.0
        %425 = vmatpush2.msra.mxu0 0.0
        %426 = vmatprep.subr.mxu0 0.0
        %427 = vmatpush2.msra.mxu0 0.0
        %428 = vmatprep.subr.mxu0 0.0
        %429 = vmatpush2.msra.mxu0 0.0
        %430 = vmatprep.subr.mxu0 0.0
        %431 = vmatpush2.msra.mxu0 0.0
        %432 = vmatprep.subr.mxu0 0.0
        %433 = vmatpush2.msra.mxu0 0.0
        %434 = vmatprep.subr.mxu0 0.0
        %435 = vmatpush2.msra.mxu0 0.0
        %436 = vmatprep.subr.mxu0 0.0
        %437 = vmatpush2.msra.mxu0 0.0
        %438 = vmatprep.mubr.f32.mxu0 0.0
        %439 = vmatmul.mubr.f32.gmra.mxu0 %v369
        %v440 = vpop.f32.mrf.mxu0
        %v441 = vadd.f32 0.0, %v440
        %v442 = vpop.f32.mrf.mxu0
        %v443 = vadd.f32 0.0, %v442
        %444 = vmatprep.mubr.f32.mxu0 0.0
        %445 = vmatmul.mubr.f32.gmra.mxu0 %v372
        %v446 = vpop.f32.mrf.mxu0
        %v447 = vadd.f32 0.0, %v446
        %v448 = vpop.f32.mrf.mxu0
        %v449 = vadd.f32 0.0, %v448
        %450 = vdwg.mxu0
        %v451 = vadd.f32 %v441, %v443
        %452 = vadd.xlane.f32.xlu0 %v451
        %v453 = vpop.xlane.xlu0 %452
        %v454 = vadd.f32 %v447, %v449
        %455 = vadd.xlane.f32.xlu0 %v454
        %v456 = vpop.xlane.xlu0 %455
        %v457 = vsub.f32 %v355, %v453
        %v458 = vsub.f32 %v357, %v453
        %v459 = vsub.f32 %v361, %v456
        %v460 = vsub.f32 %v363, %v456
        %v461 = vmul.f32 %v457, %v457
        %v462 = vmul.f32 %v458, %v458
        %v463 = vmul.f32 %v459, %v459
        %v464 = vmul.f32 %v460, %v460
        %465 = vmatprep.subr.mxu0 0.0
        %466 = vmatpush1.msra.mxu0 0.0
        %467 = vmatprep.subr.mxu0 0.0
        %468 = vmatpush1.msra.mxu0 0.0
        %469 = vmatprep.subr.mxu0 0.0
        %470 = vmatpush1.msra.mxu0 0.0
        %471 = vmatprep.subr.mxu0 0.0
        %472 = vmatpush1.msra.mxu0 0.0
        %473 = vmatprep.subr.mxu0 0.0
        %474 = vmatpush1.msra.mxu0 0.0
        %475 = vmatprep.subr.mxu0 0.0
        %476 = vmatpush1.msra.mxu0 0.0
        %477 = vmatprep.subr.mxu0 0.0
        %478 = vmatpush1.msra.mxu0 0.0
        %479 = vmatprep.subr.mxu0 0.0
        %480 = vmatpush1.msra.mxu0 0.0
        %481 = vmatprep.subr.mxu0 0.0
        %482 = vmatpush1.msra.mxu0 0.0
        %483 = vmatprep.subr.mxu0 0.0
        %484 = vmatpush1.msra.mxu0 0.0
        %485 = vmatprep.subr.mxu0 0.0
        %486 = vmatpush1.msra.mxu0 0.0
        %487 = vmatprep.subr.mxu0 0.0
        %488 = vmatpush1.msra.mxu0 0.0
        %489 = vmatprep.subr.mxu0 0.0
        %490 = vmatpush1.msra.mxu0 0.0
        %491 = vmatprep.subr.mxu0 0.0
        %492 = vmatpush1.msra.mxu0 0.0
        %493 = vmatprep.subr.mxu0 %v464
        %494 = vmatpush1.msra.mxu0 %v463
        %495 = vmatprep.subr.mxu0 %v462
        %496 = vmatpush1.msra.mxu0 %v461
        %497 = vmatprep.subr.mxu0 0.0
        %498 = vmatpush2.msra.mxu0 0.0
        %499 = vmatprep.subr.mxu0 0.0
        %500 = vmatpush2.msra.mxu0 0.0
        %501 = vmatprep.subr.mxu0 0.0
        %502 = vmatpush2.msra.mxu0 0.0
        %503 = vmatprep.subr.mxu0 0.0
        %504 = vmatpush2.msra.mxu0 0.0
        %505 = vmatprep.subr.mxu0 0.0
        %506 = vmatpush2.msra.mxu0 0.0
        %507 = vmatprep.subr.mxu0 0.0
        %508 = vmatpush2.msra.mxu0 0.0
        %509 = vmatprep.subr.mxu0 0.0
        %510 = vmatpush2.msra.mxu0 0.0
        %511 = vmatprep.subr.mxu0 0.0
        %512 = vmatpush2.msra.mxu0 0.0
        %513 = vmatprep.subr.mxu0 0.0
        %514 = vmatpush2.msra.mxu0 0.0
        %515 = vmatprep.subr.mxu0 0.0
        %516 = vmatpush2.msra.mxu0 0.0
        %517 = vmatprep.subr.mxu0 0.0
        %518 = vmatpush2.msra.mxu0 0.0
        %519 = vmatprep.subr.mxu0 0.0
        %520 = vmatpush2.msra.mxu0 0.0
        %521 = vmatprep.subr.mxu0 0.0
        %522 = vmatpush2.msra.mxu0 0.0
        %523 = vmatprep.subr.mxu0 0.0
        %524 = vmatpush2.msra.mxu0 0.0
        %525 = vmatprep.subr.mxu0 0.0
        %526 = vmatpush2.msra.mxu0 0.0
        %527 = vmatprep.subr.mxu0 0.0
        %528 = vmatpush2.msra.mxu0 0.0
        %529 = vmatprep.mubr.f32.mxu0 0.0
        %530 = vmatmul.mubr.f32.gmra.mxu0 %v369
        %v531 = vpop.f32.mrf.mxu0
        %v532 = vadd.f32 0.0, %v531
        %v533 = vpop.f32.mrf.mxu0
        %v534 = vadd.f32 0.0, %v533
        %535 = vmatprep.mubr.f32.mxu0 0.0
        %536 = vmatmul.mubr.f32.gmra.mxu0 %v372
        %v537 = vpop.f32.mrf.mxu0
        %v538 = vadd.f32 0.0, %v537
        %v539 = vpop.f32.mrf.mxu0
        %v540 = vadd.f32 0.0, %v539
        %541 = vdwg.mxu0
        %v542 = vadd.f32 %v532, %v534
        %543 = vadd.xlane.f32.xlu0 %v542
        %v544 = vpop.xlane.xlu0 %543
        %v545 = vadd.f32 %v538, %v540
        %546 = vadd.xlane.f32.xlu0 %v545
        %v547 = vpop.xlane.xlu0 %546
        %v548 = vadd.f32 %v544, 1e-05
        %v549 = vadd.f32 %v547, 1e-05
        %v550 = vrsqrt.pop %v548
        %v551 = vrsqrt.pop %v549
        %v552 = vmul.f32 %v457, %v550
        %v553 = vmul.f32 %v458, %v550
        %v554 = vmul.f32 %v459, %v551
        %v555 = vmul.f32 %v460, %v551
        %v556 = vld [vmem:[%s3] sm:$0xff]
        %v557 = vld [vmem:[%s3 + $0x8] sm:$0xff]
        %559 = vset.pattern.permute.xlu0 0
        %560 = vperm.xlu0 %559, %v556
        %v561 = vpop.permute.xlu0 %560
        %564 = vset.pattern.permute.xlu0 0
        %565 = vperm.xlu0 %564, %v557
        %v566 = vpop.permute.xlu0 %565
        %v568 = vmul.f32 %v552, %v561
        %v569 = vmul.f32 %v553, %v561
        %v570 = vmul.f32 %v554, %v566
        %v571 = vmul.f32 %v555, %v566
        %v572 = vld [vmem:[%s4] sm:$0xff]
        %v573 = vld [vmem:[%s4 + $0x8] sm:$0xff]
        %575 = vset.pattern.permute.xlu0 0
        %576 = vperm.xlu0 %575, %v572
        %v577 = vpop.permute.xlu0 %576
        %580 = vset.pattern.permute.xlu0 0
        %581 = vperm.xlu0 %580, %v573
        %v582 = vpop.permute.xlu0 %581
        %v584 = vadd.f32 %v568, %v577
        %v585 = vadd.f32 %v569, %v577
        %v586 = vadd.f32 %v570, %v582
        %v587 = vadd.f32 %v571, %v582
        %v588 = vmax.f32 %v584, 0.0
        %v589 = vmax.f32 %v585, 0.0
        %v590 = vmax.f32 %v586, 0.0
        %v591 = vmax.f32 %v587, 0.0
        %v592 = vand.u32 2147483647, %v584
        %v593 = vand.u32 2147483647, %v585
        %v594 = vand.u32 2147483647, %v586
        %v595 = vand.u32 2147483647, %v587
        %v596 = vsub.f32 0.0, %v592
        %v597 = vsub.f32 0.0, %v593
        %v598 = vsub.f32 0.0, %v594
        %v599 = vsub.f32 0.0, %v595
        %v600 = vmul.f32 %v596, 1.442695
        %v601 = vpow.pop %v600
        %v602 = vmul.f32 %v597, 1.442695
        %v603 = vpow.pop %v602
        %v604 = vmul.f32 %v598, 1.442695
        %v605 = vpow.pop %v604
        %v606 = vmul.f32 %v599, 1.442695
        %v607 = vpow.pop %v606
        %v608 = vadd.f32 %v601, 1.0
        %v609 = vlog2.pop %v608
        %v610 = vmul.f32 %v609, 0.6931472
        %v611 = vmul.f32 -0.5, %v601
        %v612 = vadd.f32 %v611, 1.0
        %v613 = vmul.f32 %v612, %v601
        %v614 = vand.u32 2147483647, %v601
        %vm615 = vcmp.lt.f32.partialorder %v614, 0.0004427343
        %v616 = vsel %vm615, %v613, %v610
        %v617 = vadd.f32 %v603, 1.0
        %v618 = vlog2.pop %v617
        %v619 = vmul.f32 %v618, 0.6931472
        %v620 = vmul.f32 -0.5, %v603
        %v621 = vadd.f32 %v620, 1.0
        %v622 = vmul.f32 %v621, %v603
        %v623 = vand.u32 2147483647, %v603
        %vm624 = vcmp.lt.f32.partialorder %v623, 0.0004427343
        %v625 = vsel %vm624, %v622, %v619
        %v626 = vadd.f32 %v605, 1.0
        %v627 = vlog2.pop %v626
        %v628 = vmul.f32 %v627, 0.6931472
        %v629 = vmul.f32 -0.5, %v605
        %v630 = vadd.f32 %v629, 1.0
        %v631 = vmul.f32 %v630, %v605
        %v632 = vand.u32 2147483647, %v605
        %vm633 = vcmp.lt.f32.partialorder %v632, 0.0004427343
        %v634 = vsel %vm633, %v631, %v628
        %v635 = vadd.f32 %v607, 1.0
        %v636 = vlog2.pop %v635
        %v637 = vmul.f32 %v636, 0.6931472
        %v638 = vmul.f32 -0.5, %v607
        %v639 = vadd.f32 %v638, 1.0
        %v640 = vmul.f32 %v639, %v607
        %v641 = vand.u32 2147483647, %v607
        %vm642 = vcmp.lt.f32.partialorder %v641, 0.0004427343
        %v643 = vsel %vm642, %v640, %v637
        %v644 = vadd.f32 %v588, %v616
        %v645 = vadd.f32 %v589, %v625
        %v646 = vadd.f32 %v590, %v634
        %v647 = vadd.f32 %v591, %v643
        %v648 = vtanh.pop %v644
        %v649 = vtanh.pop %v645
        %v650 = vtanh.pop %v646
        %v651 = vtanh.pop %v647
        %v652 = vmul.f32 %v584, %v648
        %v653 = vmul.f32 %v585, %v649
        %v654 = vmul.f32 %v586, %v650
        %v655 = vmul.f32 %v587, %v651
        %656 = vst [vmem:[%s244] sm:$0xff] %v652
        %657 = vst [vmem:[%s244 + $0x8] sm:$0xff] %v653
        %658 = vst [vmem:[%s244 + $0x10] sm:$0xff] %v654
        %659 = vst [vmem:[%s244 + $0x18] sm:$0xff] %v655
        %s660 = sand.u32 %s159, 1
        %s661 = scalar_lea.sflag [#allocation3], %s660
        %s662 = sand.u32 %s159, 1
        %s663 = smul.addr %s662, 32
        %s664 = scalar_lea.vmem [#allocation2], %s663
        // Predicated region
        $region45: #{tpu_custom_call.1} parent=43 // pred_check
          %p665 = pneg %p169
        $region46: #{tpu_custom_call.1} parent=43 // pred_check_branch
          %667 = sbr.rel (%p665) target = $region48
        $region47: #{tpu_custom_call.1} parent=43 // pred_region
          %s669 = ssub.s32 512, 512
          %670 = vsyncadd %s661, %s669
          %s671 = smul.addr %s20, 4
          %s672 = smul.addr %s671, 128
          %s673 = scalar_lea.hbm %s6, %s672
          %s674 = sshll.u32 %s664, 4
          %s675 = int_to_ptr.vmem [resolvable:$true] %s674
          %680 = dma.vmem_to_hbm [thread:$0]  %s675, 512, %s673, %s661, 256, 256, 16
        $region48: #{tpu_custom_call.1} parent=43 // pred_fallthru
          _
      $region44: #{tpu_custom_call.1} parent=5 // pred_fallthru
        _
      %p681 = scmp.le.s32.totalorder 2, %s15
      // Predicated region
      $region49: #{tpu_custom_call.1} parent=5 // pred_check
        %p682 = pneg %p681
      $region50: #{tpu_custom_call.1} parent=5 // pred_check_branch
        %684 = sbr.rel (%p682) target = $region52
      $region51: #{tpu_custom_call.1} parent=5 // pred_region
        %s685 = ssub.s32 %s15, 2
        // Predicated region
        $region53: #{tpu_custom_call.1} parent=51 // pred_check
          %p686 = pneg %p175
        $region54: #{tpu_custom_call.1} parent=51 // pred_check_branch
          %688 = sbr.rel (%p686) target = $region56
        $region55: #{tpu_custom_call.1} parent=51 // pred_region
          %s689 = sand.u32 %s160, 1
          %s690 = scalar_lea.sflag [#allocation3], %s689
          %s691 = sand.u32 %s160, 1
          %s692 = smul.addr %s691, 32
          %s693 = scalar_lea.vmem [#allocation2], %s692
          %694 = dma.done %s690, 512
        $region56: #{tpu_custom_call.1} parent=51 // pred_fallthru
          _
      $region52: #{tpu_custom_call.1} parent=5 // pred_fallthru
        _
    $region6: #{tpu_custom_call.1} parent=1 // loop_footer
      %s19 = sadd.s32 1, %s15
    $region7: #{tpu_custom_call.1} parent=1 // loop_footer_branch
      %14 = sbr.rel target = $region3
    $region8: #{tpu_custom_call.1} parent=1 // loop_exit
      _
    %695 = vsyncpa [#allocation3], 1
    %s696 = scalar_lea.sflag [#allocation3], 1
    %697 = vsyncpa %s696, 1

</llo_original>
